<compile_context>
chip_gen: v7x
topology: tpu7x:2x2x1
jax: 0.10.0
libtpu: 0.0.40
codegen_flags: <defaults>
</compile_context>

<pallas_src>
import functools

import jax
import jax.numpy as jnp
from jax.experimental import pallas as pl
from jax.experimental.pallas import tpu as pltpu


def _round_up(v, m):
    return ((v + m - 1) // m) * m


def _lstm_subnet_kernel(x_ref, wih_ref, whh_ref, b_ref, wout_ref, bout_ref,
                        y_ref, *, mxu_dtype):
    """One batch-block of the SubNet_mt forward.

    x_ref    : (T, Bblk, IN)   time-major activations
    wih_ref  : (IN, 4H)        W_ih^T      (PyTorch gate order [i, f, g, o])
    whh_ref  : (H, 4H)         W_hh^T
    b_ref    : (1, 4H)         b_ih + b_hh
    wout_ref : (H, OUTP)       W_lin^T, zero-padded to a lane multiple
    bout_ref : (1, OUTP)       b_lin,  zero-padded
    y_ref    : (Bblk, OUTP)    relu(h_T @ W_lin^T + b_lin)
    """
    T, B, IN = x_ref.shape
    H = whh_ref.shape[0]

    mx = lambda a: a.astype(mxu_dtype)   # cast only at the MXU; gating stays f32

    # ---- hoisted input projection: ONE MXU GEMM over all T*B rows ----------
    x2 = x_ref[...].reshape(T * B, IN)
    xw = (jnp.dot(mx(x2), mx(wih_ref[...]),
                  preferred_element_type=jnp.float32)
          + b_ref[...]).reshape(T, B, 4 * H)          # time-major: xw[t] is one
                                                      # contiguous (B, 4H) block
    whh = mx(whh_ref[...])                            # cast once, reused T times
    # TODO(synk): hold whh resident in the MXU across steps via
    # pltpu.matmul_push_rhs / matmul_acc_lhs / matmul_pop to trim the serial
    # h@Whh issue latency (kept on jnp.dot here for portable lowering).

    h = jnp.zeros((B, H), jnp.float32)
    c = jnp.zeros((B, H), jnp.float32)

    # T is small & static -> fully unrolled; only h@Whh + gating are serial
    # (the xw[t] read does not depend on h).
    # TODO(synk): for long sequences, chunk T with lax.fori_loop + VMEM
    # scratch; size chunks against v7x's 64 MiB physical / 32 MiB scoped VMEM
    # (not v5e/v6e's 128 MiB) and set vmem_limit_bytes explicitly.
    for t in range(T):
        gates = xw[t] + jnp.dot(mx(h), whh, preferred_element_type=jnp.float32)
        # One full-width sigmoid + one full-width tanh, then static lane
        # slices in PyTorch's native [i, f, g, o] order.
        # TODO(synk): when 4H == 128 the slices could be replaced by
        # pltpu.roll lane rotations on full vregs (XLU slot) -- marginal at
        # these sizes, so the portable static-slice form is kept.
        sig = jax.nn.sigmoid(gates)
        tnh = jnp.tanh(gates)
        i_g = sig[:, 0 * H:1 * H]
        f_g = sig[:, 1 * H:2 * H]
        g_g = tnh[:, 2 * H:3 * H]
        o_g = sig[:, 3 * H:4 * H]
        c = f_g * c + i_g * g_g
        h = o_g * jnp.tanh(c)

    # dropout(p=0) is identity (num_layers == 1); linear head + relu.
    y = jnp.dot(mx(h), mx(wout_ref[...]),
                preferred_element_type=jnp.float32) + bout_ref[...]
    y_ref[...] = jnp.maximum(y, 0.0).astype(y_ref.dtype)


@functools.partial(jax.jit, static_argnames=("out_size", "use_bf16_mxu"))
def subnet_mt_forward(x, params, out_size, use_bf16_mxu=False):
    """x: (B, T, in_size) batch-first, like the PyTorch module.

    `params` must come from prepare_params(): all weight preprocessing is done
    once there, NOT in this per-call path."""
    B, T, in_size = x.shape
    H = params["whh_t"].shape[0]
    out_pad = params["wout_t"].shape[1]

    # Batch padding / blocking: sublane multiple of 8; batch blocks map to a
    # "parallel" grid axis so big batches pipeline and can use both
    # TensorCores on v7x.  (Biggest throughput lever is packing many samples
    # per call: the in-kernel xw buffer is only B_pad*T*4H*4 bytes.)
    B_pad = _round_up(B, 8)
    b_blk = min(B_pad, 256)
    B_pad = _round_up(B_pad, b_blk)

    # Time-major activations, zero-padded batch (few-KB transform per call).
    x_tm = jnp.transpose(x.astype(jnp.float32), (1, 0, 2))       # (T, B, IN)
    x_tm = jnp.pad(x_tm, ((0, 0), (0, B_pad - B), (0, 0)))

    mxu_dtype = jnp.bfloat16 if use_bf16_mxu else jnp.float32

    flops = int(2 * B_pad * T * in_size * 4 * H          # input projection
                + 2 * T * B_pad * H * 4 * H              # recurrence
                + 2 * B_pad * H * out_pad)               # linear head
    transcendentals = int(T * B_pad * 9 * H)
    bytes_accessed = int(4 * (B_pad * T * in_size + in_size * 4 * H
                              + H * 4 * H + 4 * H + H * out_pad + out_pad
                              + B_pad * out_pad))

    grid_spec = pltpu.PrefetchScalarGridSpec(
        num_scalar_prefetch=0,
        grid=(B_pad // b_blk,),                        # batch blocks (parallel)
        in_specs=[
            pl.BlockSpec((T, b_blk, in_size), lambda b: (0, b, 0)),   # x
            pl.BlockSpec((in_size, 4 * H), lambda b: (0, 0)),         # W_ih^T
            pl.BlockSpec((H, 4 * H), lambda b: (0, 0)),               # W_hh^T
            pl.BlockSpec((1, 4 * H), lambda b: (0, 0)),               # bias
            pl.BlockSpec((H, out_pad), lambda b: (0, 0)),             # W_lin^T
            pl.BlockSpec((1, out_pad), lambda b: (0, 0)),             # b_lin
        ],
        out_specs=pl.BlockSpec((b_blk, out_pad), lambda b: (b, 0)),
    )

    y = pl.pallas_call(
        functools.partial(_lstm_subnet_kernel, mxu_dtype=mxu_dtype),
        out_shape=jax.ShapeDtypeStruct((B_pad, out_pad), jnp.float32),
        grid_spec=grid_spec,
        compiler_params=pltpu.CompilerParams(
            dimension_semantics=("parallel",)),
        cost_estimate=pl.CostEstimate(flops=flops,
                                      transcendentals=transcendentals,
                                      bytes_accessed=bytes_accessed),
    )(x_tm, params["wih_t"], params["whh_t"], params["b"],
      params["wout_t"], params["bout"])

    return y[:B, :out_size]


def make_raw_params(key, in_size, hidden_size, out_size):
    """Synthetic parameters with the PyTorch module's layout/init
    (nn.LSTM + nn.Linear, gate order [i, f, g, o])."""
    k = jax.random.split(key, 6)
    s = 1.0 / jnp.sqrt(hidden_size)
    u = lambda kk, shape: jax.random.uniform(kk, shape, minval=-s, maxval=s,
                                             dtype=jnp.float32)
    return {
        "w_ih": u(k[0], (4 * hidden_size, in_size)),
        "w_hh": u(k[1], (4 * hidden_size, hidden_size)),
        "b_ih": u(k[2], (4 * hidden_size,)),
        "b_hh": u(k[3], (4 * hidden_size,)),
        "w_lin": u(k[4], (out_size, hidden_size)),
        "b_lin": u(k[5], (out_size,)),
    }


def prepare_params(raw):
    """ONE-TIME preprocessing (hoisted out of the per-call path): transposes,
    bias fusion, f32 casts, and lane-padding of the linear head."""
    H = raw["w_hh"].shape[1]
    out_size = raw["w_lin"].shape[0]
    out_pad = _round_up(out_size, 128)        # lane multiple -> unmasked store
    wout = jnp.zeros((H, out_pad), jnp.float32).at[:, :out_size].set(
        raw["w_lin"].T.astype(jnp.float32))
    bout = jnp.zeros((1, out_pad), jnp.float32).at[:, :out_size].set(
        raw["b_lin"].astype(jnp.float32))
    return {
        "wih_t": raw["w_ih"].T.astype(jnp.float32),                  # (in, 4H)
        "whh_t": raw["w_hh"].T.astype(jnp.float32),                  # (H, 4H)
        "b": (raw["b_ih"] + raw["b_hh"]).reshape(1, -1).astype(jnp.float32),
        "wout_t": wout,                                              # (H, outp)
        "bout": bout,                                                # (1, outp)
    }


def _reference_forward(x, raw):
    """Pure-JAX reference of the PyTorch forward (gate order [i, f, g, o])."""
    B, T, _ = x.shape
    H = raw["w_hh"].shape[1]
    wih_t = raw["w_ih"].T
    whh_t = raw["w_hh"].T
    b = (raw["b_ih"] + raw["b_hh"])[None, :]

    def step(carry, x_t):
        h, c = carry
        gates = x_t @ wih_t + h @ whh_t + b
        i = jax.nn.sigmoid(gates[:, 0 * H:1 * H])
        f = jax.nn.sigmoid(gates[:, 1 * H:2 * H])
        g = jnp.tanh(gates[:, 2 * H:3 * H])
        o = jax.nn.sigmoid(gates[:, 3 * H:4 * H])
        c = f * c + i * g
        h = o * jnp.tanh(c)
        return (h, c), None

    h0 = jnp.zeros((B, H), jnp.float32)
    (h, _), _ = jax.lax.scan(step, (h0, h0), jnp.transpose(x, (1, 0, 2)))
    return jnp.maximum(h @ raw["w_lin"].T + raw["b_lin"], 0.0)


if __name__ == "__main__":
    B, T, IN, HID, OUT = 2, 8, 16, 32, 16
    key = jax.random.PRNGKey(0)
    kx, kp = jax.random.split(key)
    x = jax.random.normal(kx, (B, T, IN), dtype=jnp.float32)

    raw = make_raw_params(kp, IN, HID, OUT)
    params = prepare_params(raw)          # one-time; NOT in the per-call path

    # f32-MXU path (bit-faithful to the PyTorch math).
    y = jax.block_until_ready(subnet_mt_forward(x, params, out_size=OUT))
    y_ref = _reference_forward(x, raw)
    assert y.shape == (B, OUT)
    assert jnp.allclose(y, y_ref, atol=1e-5, rtol=1e-5), "f32 path mismatch"

    # bf16-MXU-operand path (v6e/v7x native bf16 MXU); gating stays f32, so
    # only matmul operand rounding differs -> loose tolerance.
    y_bf16 = jax.block_until_ready(
        subnet_mt_forward(x, params, out_size=OUT, use_bf16_mxu=True))
    assert y_bf16.shape == (B, OUT)
    assert jnp.allclose(y_bf16, y_ref, atol=5e-2, rtol=5e-2), \
        "bf16 path mismatch"

    print("KERNEL_OK")
</pallas_src>

<mosaic_0001>
module attributes {stable_mosaic.version = 11 : i64} {
  func.func @_lstm_subnet_kernel(%arg0: i32, %arg1: memref<8x8x16xf32, #tpu.memory_space<vmem>>, %arg2: memref<16x128xf32, #tpu.memory_space<vmem>>, %arg3: memref<32x128xf32, #tpu.memory_space<vmem>>, %arg4: memref<1x128xf32, #tpu.memory_space<vmem>>, %arg5: memref<32x128xf32, #tpu.memory_space<vmem>>, %arg6: memref<1x128xf32, #tpu.memory_space<vmem>>, %arg7: memref<8x128xf32, #tpu.memory_space<vmem>>) attributes {dimension_semantics = [#tpu.dimension_semantics<parallel>], iteration_bounds = array<i64: 1>, scalar_prefetch = 0 : i64, scratch_operands = 0 : i64, tpu.core_type = #tpu.core_type<tc>, window_params = [{transform_indices = @transform_0, window_bounds = array<i64: 8, 8, 16>}, {pipeline_mode = #tpu.pipeline_mode<synchronous>, transform_indices = @transform_1, window_bounds = array<i64: 16, 128>}, {pipeline_mode = #tpu.pipeline_mode<synchronous>, transform_indices = @transform_2, window_bounds = array<i64: 32, 128>}, {pipeline_mode = #tpu.pipeline_mode<synchronous>, transform_indices = @transform_3, window_bounds = array<i64: 1, 128>}, {pipeline_mode = #tpu.pipeline_mode<synchronous>, transform_indices = @transform_4, window_bounds = array<i64: 32, 128>}, {pipeline_mode = #tpu.pipeline_mode<synchronous>, transform_indices = @transform_5, window_bounds = array<i64: 1, 128>}, {transform_indices = @transform_6, window_bounds = array<i64: 8, 128>}]} {
    %c0 = arith.constant 0 : index
    %c0_0 = arith.constant 0 : index
    %c0_1 = arith.constant 0 : index
    %0 = vector.load %arg1[%c0, %c0_0, %c0_1] : memref<8x8x16xf32, #tpu.memory_space<vmem>>, vector<8x8x16xf32>
    %1 = vector.shape_cast %0 : vector<8x8x16xf32> to vector<64x16xf32>
    %c0_2 = arith.constant 0 : index
    %c0_3 = arith.constant 0 : index
    %2 = vector.load %arg2[%c0_2, %c0_3] : memref<16x128xf32, #tpu.memory_space<vmem>>, vector<16x128xf32>
    %cst = arith.constant dense<0.000000e+00> : vector<64x128xf32>
    %3 = tpu.matmul %1, %2, %cst {dimension_numbers = #tpu.dot_dimension_numbers<[1], [0], [0], [1], [0, 0, 1, 1], [], []>} : vector<64x16xf32>, vector<16x128xf32>, vector<64x128xf32> -> vector<64x128xf32>
    %c0_4 = arith.constant 0 : index
    %c0_5 = arith.constant 0 : index
    %4 = vector.load %arg4[%c0_4, %c0_5] : memref<1x128xf32, #tpu.memory_space<vmem>>, vector<1x128xf32>
    %5 = vector.broadcast %4 : vector<1x128xf32> to vector<64x128xf32>
    %6 = arith.addf %3, %5 : vector<64x128xf32>
    %7 = vector.shape_cast %6 : vector<64x128xf32> to vector<8x8x128xf32>
    %c0_6 = arith.constant 0 : index
    %c0_7 = arith.constant 0 : index
    %8 = vector.load %arg3[%c0_6, %c0_7] : memref<32x128xf32, #tpu.memory_space<vmem>>, vector<32x128xf32>
    %cst_8 = arith.constant 0.000000e+00 : f32
    %9 = vector.broadcast %cst_8 : f32 to vector<8x32xf32>
    %cst_9 = arith.constant 0.000000e+00 : f32
    %10 = vector.broadcast %cst_9 : f32 to vector<8x32xf32>
    %11 = vector.extract_strided_slice %7 {offsets = [0, 0, 0], sizes = [1, 8, 128], strides = [1, 1, 1]} : vector<8x8x128xf32> to vector<1x8x128xf32>
    %12 = vector.shape_cast %11 : vector<1x8x128xf32> to vector<8x128xf32>
    %cst_10 = arith.constant dense<0.000000e+00> : vector<8x128xf32>
    %13 = tpu.matmul %9, %8, %cst_10 {dimension_numbers = #tpu.dot_dimension_numbers<[1], [0], [0], [1], [0, 0, 1, 1], [], []>} : vector<8x32xf32>, vector<32x128xf32>, vector<8x128xf32> -> vector<8x128xf32>
    %14 = arith.addf %12, %13 : vector<8x128xf32>
    %15 = arith.negf %14 : vector<8x128xf32>
    %16 = math.exp %15 : vector<8x128xf32>
    %cst_11 = arith.constant 1.000000e+00 : f32
    %17 = vector.broadcast %cst_11 : f32 to vector<8x128xf32>
    %18 = arith.addf %17, %16 : vector<8x128xf32>
    %19 = arith.divf %17, %18 : vector<8x128xf32>
    %20 = math.tanh %14 : vector<8x128xf32>
    %21 = vector.extract_strided_slice %19 {offsets = [0, 0], sizes = [8, 32], strides = [1, 1]} : vector<8x128xf32> to vector<8x32xf32>
    %22 = vector.extract_strided_slice %19 {offsets = [0, 32], sizes = [8, 32], strides = [1, 1]} : vector<8x128xf32> to vector<8x32xf32>
    %23 = vector.extract_strided_slice %20 {offsets = [0, 64], sizes = [8, 32], strides = [1, 1]} : vector<8x128xf32> to vector<8x32xf32>
    %24 = vector.extract_strided_slice %19 {offsets = [0, 96], sizes = [8, 32], strides = [1, 1]} : vector<8x128xf32> to vector<8x32xf32>
    %25 = arith.mulf %22, %10 : vector<8x32xf32>
    %26 = arith.mulf %21, %23 : vector<8x32xf32>
    %27 = arith.addf %25, %26 : vector<8x32xf32>
    %28 = math.tanh %27 : vector<8x32xf32>
    %29 = arith.mulf %24, %28 : vector<8x32xf32>
    %30 = vector.extract_strided_slice %7 {offsets = [1, 0, 0], sizes = [1, 8, 128], strides = [1, 1, 1]} : vector<8x8x128xf32> to vector<1x8x128xf32>
    %31 = vector.shape_cast %30 : vector<1x8x128xf32> to vector<8x128xf32>
    %cst_12 = arith.constant dense<0.000000e+00> : vector<8x128xf32>
    %32 = tpu.matmul %29, %8, %cst_12 {dimension_numbers = #tpu.dot_dimension_numbers<[1], [0], [0], [1], [0, 0, 1, 1], [], []>} : vector<8x32xf32>, vector<32x128xf32>, vector<8x128xf32> -> vector<8x128xf32>
    %33 = arith.addf %31, %32 : vector<8x128xf32>
    %34 = arith.negf %33 : vector<8x128xf32>
    %35 = math.exp %34 : vector<8x128xf32>
    %cst_13 = arith.constant 1.000000e+00 : f32
    %36 = vector.broadcast %cst_13 : f32 to vector<8x128xf32>
    %37 = arith.addf %36, %35 : vector<8x128xf32>
    %38 = arith.divf %36, %37 : vector<8x128xf32>
    %39 = math.tanh %33 : vector<8x128xf32>
    %40 = vector.extract_strided_slice %38 {offsets = [0, 0], sizes = [8, 32], strides = [1, 1]} : vector<8x128xf32> to vector<8x32xf32>
    %41 = vector.extract_strided_slice %38 {offsets = [0, 32], sizes = [8, 32], strides = [1, 1]} : vector<8x128xf32> to vector<8x32xf32>
    %42 = vector.extract_strided_slice %39 {offsets = [0, 64], sizes = [8, 32], strides = [1, 1]} : vector<8x128xf32> to vector<8x32xf32>
    %43 = vector.extract_strided_slice %38 {offsets = [0, 96], sizes = [8, 32], strides = [1, 1]} : vector<8x128xf32> to vector<8x32xf32>
    %44 = arith.mulf %41, %27 : vector<8x32xf32>
    %45 = arith.mulf %40, %42 : vector<8x32xf32>
    %46 = arith.addf %44, %45 : vector<8x32xf32>
    %47 = math.tanh %46 : vector<8x32xf32>
    %48 = arith.mulf %43, %47 : vector<8x32xf32>
    %49 = vector.extract_strided_slice %7 {offsets = [2, 0, 0], sizes = [1, 8, 128], strides = [1, 1, 1]} : vector<8x8x128xf32> to vector<1x8x128xf32>
    %50 = vector.shape_cast %49 : vector<1x8x128xf32> to vector<8x128xf32>
    %cst_14 = arith.constant dense<0.000000e+00> : vector<8x128xf32>
    %51 = tpu.matmul %48, %8, %cst_14 {dimension_numbers = #tpu.dot_dimension_numbers<[1], [0], [0], [1], [0, 0, 1, 1], [], []>} : vector<8x32xf32>, vector<32x128xf32>, vector<8x128xf32> -> vector<8x128xf32>
    %52 = arith.addf %50, %51 : vector<8x128xf32>
    %53 = arith.negf %52 : vector<8x128xf32>
    %54 = math.exp %53 : vector<8x128xf32>
    %cst_15 = arith.constant 1.000000e+00 : f32
    %55 = vector.broadcast %cst_15 : f32 to vector<8x128xf32>
    %56 = arith.addf %55, %54 : vector<8x128xf32>
    %57 = arith.divf %55, %56 : vector<8x128xf32>
    %58 = math.tanh %52 : vector<8x128xf32>
    %59 = vector.extract_strided_slice %57 {offsets = [0, 0], sizes = [8, 32], strides = [1, 1]} : vector<8x128xf32> to vector<8x32xf32>
    %60 = vector.extract_strided_slice %57 {offsets = [0, 32], sizes = [8, 32], strides = [1, 1]} : vector<8x128xf32> to vector<8x32xf32>
    %61 = vector.extract_strided_slice %58 {offsets = [0, 64], sizes = [8, 32], strides = [1, 1]} : vector<8x128xf32> to vector<8x32xf32>
    %62 = vector.extract_strided_slice %57 {offsets = [0, 96], sizes = [8, 32], strides = [1, 1]} : vector<8x128xf32> to vector<8x32xf32>
    %63 = arith.mulf %60, %46 : vector<8x32xf32>
    %64 = arith.mulf %59, %61 : vector<8x32xf32>
    %65 = arith.addf %63, %64 : vector<8x32xf32>
    %66 = math.tanh %65 : vector<8x32xf32>
    %67 = arith.mulf %62, %66 : vector<8x32xf32>
    %68 = vector.extract_strided_slice %7 {offsets = [3, 0, 0], sizes = [1, 8, 128], strides = [1, 1, 1]} : vector<8x8x128xf32> to vector<1x8x128xf32>
    %69 = vector.shape_cast %68 : vector<1x8x128xf32> to vector<8x128xf32>
    %cst_16 = arith.constant dense<0.000000e+00> : vector<8x128xf32>
    %70 = tpu.matmul %67, %8, %cst_16 {dimension_numbers = #tpu.dot_dimension_numbers<[1], [0], [0], [1], [0, 0, 1, 1], [], []>} : vector<8x32xf32>, vector<32x128xf32>, vector<8x128xf32> -> vector<8x128xf32>
    %71 = arith.addf %69, %70 : vector<8x128xf32>
    %72 = arith.negf %71 : vector<8x128xf32>
    %73 = math.exp %72 : vector<8x128xf32>
    %cst_17 = arith.constant 1.000000e+00 : f32
    %74 = vector.broadcast %cst_17 : f32 to vector<8x128xf32>
    %75 = arith.addf %74, %73 : vector<8x128xf32>
    %76 = arith.divf %74, %75 : vector<8x128xf32>
    %77 = math.tanh %71 : vector<8x128xf32>
    %78 = vector.extract_strided_slice %76 {offsets = [0, 0], sizes = [8, 32], strides = [1, 1]} : vector<8x128xf32> to vector<8x32xf32>
    %79 = vector.extract_strided_slice %76 {offsets = [0, 32], sizes = [8, 32], strides = [1, 1]} : vector<8x128xf32> to vector<8x32xf32>
    %80 = vector.extract_strided_slice %77 {offsets = [0, 64], sizes = [8, 32], strides = [1, 1]} : vector<8x128xf32> to vector<8x32xf32>
    %81 = vector.extract_strided_slice %76 {offsets = [0, 96], sizes = [8, 32], strides = [1, 1]} : vector<8x128xf32> to vector<8x32xf32>
    %82 = arith.mulf %79, %65 : vector<8x32xf32>
    %83 = arith.mulf %78, %80 : vector<8x32xf32>
    %84 = arith.addf %82, %83 : vector<8x32xf32>
    %85 = math.tanh %84 : vector<8x32xf32>
    %86 = arith.mulf %81, %85 : vector<8x32xf32>
    %87 = vector.extract_strided_slice %7 {offsets = [4, 0, 0], sizes = [1, 8, 128], strides = [1, 1, 1]} : vector<8x8x128xf32> to vector<1x8x128xf32>
    %88 = vector.shape_cast %87 : vector<1x8x128xf32> to vector<8x128xf32>
    %cst_18 = arith.constant dense<0.000000e+00> : vector<8x128xf32>
    %89 = tpu.matmul %86, %8, %cst_18 {dimension_numbers = #tpu.dot_dimension_numbers<[1], [0], [0], [1], [0, 0, 1, 1], [], []>} : vector<8x32xf32>, vector<32x128xf32>, vector<8x128xf32> -> vector<8x128xf32>
    %90 = arith.addf %88, %89 : vector<8x128xf32>
    %91 = arith.negf %90 : vector<8x128xf32>
    %92 = math.exp %91 : vector<8x128xf32>
    %cst_19 = arith.constant 1.000000e+00 : f32
    %93 = vector.broadcast %cst_19 : f32 to vector<8x128xf32>
    %94 = arith.addf %93, %92 : vector<8x128xf32>
    %95 = arith.divf %93, %94 : vector<8x128xf32>
    %96 = math.tanh %90 : vector<8x128xf32>
    %97 = vector.extract_strided_slice %95 {offsets = [0, 0], sizes = [8, 32], strides = [1, 1]} : vector<8x128xf32> to vector<8x32xf32>
    %98 = vector.extract_strided_slice %95 {offsets = [0, 32], sizes = [8, 32], strides = [1, 1]} : vector<8x128xf32> to vector<8x32xf32>
    %99 = vector.extract_strided_slice %96 {offsets = [0, 64], sizes = [8, 32], strides = [1, 1]} : vector<8x128xf32> to vector<8x32xf32>
    %100 = vector.extract_strided_slice %95 {offsets = [0, 96], sizes = [8, 32], strides = [1, 1]} : vector<8x128xf32> to vector<8x32xf32>
    %101 = arith.mulf %98, %84 : vector<8x32xf32>
    %102 = arith.mulf %97, %99 : vector<8x32xf32>
    %103 = arith.addf %101, %102 : vector<8x32xf32>
    %104 = math.tanh %103 : vector<8x32xf32>
    %105 = arith.mulf %100, %104 : vector<8x32xf32>
    %106 = vector.extract_strided_slice %7 {offsets = [5, 0, 0], sizes = [1, 8, 128], strides = [1, 1, 1]} : vector<8x8x128xf32> to vector<1x8x128xf32>
    %107 = vector.shape_cast %106 : vector<1x8x128xf32> to vector<8x128xf32>
    %cst_20 = arith.constant dense<0.000000e+00> : vector<8x128xf32>
    %108 = tpu.matmul %105, %8, %cst_20 {dimension_numbers = #tpu.dot_dimension_numbers<[1], [0], [0], [1], [0, 0, 1, 1], [], []>} : vector<8x32xf32>, vector<32x128xf32>, vector<8x128xf32> -> vector<8x128xf32>
    %109 = arith.addf %107, %108 : vector<8x128xf32>
    %110 = arith.negf %109 : vector<8x128xf32>
    %111 = math.exp %110 : vector<8x128xf32>
    %cst_21 = arith.constant 1.000000e+00 : f32
    %112 = vector.broadcast %cst_21 : f32 to vector<8x128xf32>
    %113 = arith.addf %112, %111 : vector<8x128xf32>
    %114 = arith.divf %112, %113 : vector<8x128xf32>
    %115 = math.tanh %109 : vector<8x128xf32>
    %116 = vector.extract_strided_slice %114 {offsets = [0, 0], sizes = [8, 32], strides = [1, 1]} : vector<8x128xf32> to vector<8x32xf32>
    %117 = vector.extract_strided_slice %114 {offsets = [0, 32], sizes = [8, 32], strides = [1, 1]} : vector<8x128xf32> to vector<8x32xf32>
    %118 = vector.extract_strided_slice %115 {offsets = [0, 64], sizes = [8, 32], strides = [1, 1]} : vector<8x128xf32> to vector<8x32xf32>
    %119 = vector.extract_strided_slice %114 {offsets = [0, 96], sizes = [8, 32], strides = [1, 1]} : vector<8x128xf32> to vector<8x32xf32>
    %120 = arith.mulf %117, %103 : vector<8x32xf32>
    %121 = arith.mulf %116, %118 : vector<8x32xf32>
    %122 = arith.addf %120, %121 : vector<8x32xf32>
    %123 = math.tanh %122 : vector<8x32xf32>
    %124 = arith.mulf %119, %123 : vector<8x32xf32>
    %125 = vector.extract_strided_slice %7 {offsets = [6, 0, 0], sizes = [1, 8, 128], strides = [1, 1, 1]} : vector<8x8x128xf32> to vector<1x8x128xf32>
    %126 = vector.shape_cast %125 : vector<1x8x128xf32> to vector<8x128xf32>
    %cst_22 = arith.constant dense<0.000000e+00> : vector<8x128xf32>
    %127 = tpu.matmul %124, %8, %cst_22 {dimension_numbers = #tpu.dot_dimension_numbers<[1], [0], [0], [1], [0, 0, 1, 1], [], []>} : vector<8x32xf32>, vector<32x128xf32>, vector<8x128xf32> -> vector<8x128xf32>
    %128 = arith.addf %126, %127 : vector<8x128xf32>
    %129 = arith.negf %128 : vector<8x128xf32>
    %130 = math.exp %129 : vector<8x128xf32>
    %cst_23 = arith.constant 1.000000e+00 : f32
    %131 = vector.broadcast %cst_23 : f32 to vector<8x128xf32>
    %132 = arith.addf %131, %130 : vector<8x128xf32>
    %133 = arith.divf %131, %132 : vector<8x128xf32>
    %134 = math.tanh %128 : vector<8x128xf32>
    %135 = vector.extract_strided_slice %133 {offsets = [0, 0], sizes = [8, 32], strides = [1, 1]} : vector<8x128xf32> to vector<8x32xf32>
    %136 = vector.extract_strided_slice %133 {offsets = [0, 32], sizes = [8, 32], strides = [1, 1]} : vector<8x128xf32> to vector<8x32xf32>
    %137 = vector.extract_strided_slice %134 {offsets = [0, 64], sizes = [8, 32], strides = [1, 1]} : vector<8x128xf32> to vector<8x32xf32>
    %138 = vector.extract_strided_slice %133 {offsets = [0, 96], sizes = [8, 32], strides = [1, 1]} : vector<8x128xf32> to vector<8x32xf32>
    %139 = arith.mulf %136, %122 : vector<8x32xf32>
    %140 = arith.mulf %135, %137 : vector<8x32xf32>
    %141 = arith.addf %139, %140 : vector<8x32xf32>
    %142 = math.tanh %141 : vector<8x32xf32>
    %143 = arith.mulf %138, %142 : vector<8x32xf32>
    %144 = vector.extract_strided_slice %7 {offsets = [7, 0, 0], sizes = [1, 8, 128], strides = [1, 1, 1]} : vector<8x8x128xf32> to vector<1x8x128xf32>
    %145 = vector.shape_cast %144 : vector<1x8x128xf32> to vector<8x128xf32>
    %cst_24 = arith.constant dense<0.000000e+00> : vector<8x128xf32>
    %146 = tpu.matmul %143, %8, %cst_24 {dimension_numbers = #tpu.dot_dimension_numbers<[1], [0], [0], [1], [0, 0, 1, 1], [], []>} : vector<8x32xf32>, vector<32x128xf32>, vector<8x128xf32> -> vector<8x128xf32>
    %147 = arith.addf %145, %146 : vector<8x128xf32>
    %148 = arith.negf %147 : vector<8x128xf32>
    %149 = math.exp %148 : vector<8x128xf32>
    %cst_25 = arith.constant 1.000000e+00 : f32
    %150 = vector.broadcast %cst_25 : f32 to vector<8x128xf32>
    %151 = arith.addf %150, %149 : vector<8x128xf32>
    %152 = arith.divf %150, %151 : vector<8x128xf32>
    %153 = math.tanh %147 : vector<8x128xf32>
    %154 = vector.extract_strided_slice %152 {offsets = [0, 0], sizes = [8, 32], strides = [1, 1]} : vector<8x128xf32> to vector<8x32xf32>
    %155 = vector.extract_strided_slice %152 {offsets = [0, 32], sizes = [8, 32], strides = [1, 1]} : vector<8x128xf32> to vector<8x32xf32>
    %156 = vector.extract_strided_slice %153 {offsets = [0, 64], sizes = [8, 32], strides = [1, 1]} : vector<8x128xf32> to vector<8x32xf32>
    %157 = vector.extract_strided_slice %152 {offsets = [0, 96], sizes = [8, 32], strides = [1, 1]} : vector<8x128xf32> to vector<8x32xf32>
    %158 = arith.mulf %155, %141 : vector<8x32xf32>
    %159 = arith.mulf %154, %156 : vector<8x32xf32>
    %160 = arith.addf %158, %159 : vector<8x32xf32>
    %161 = math.tanh %160 : vector<8x32xf32>
    %162 = arith.mulf %157, %161 : vector<8x32xf32>
    %c0_26 = arith.constant 0 : index
    %c0_27 = arith.constant 0 : index
    %163 = vector.load %arg5[%c0_26, %c0_27] : memref<32x128xf32, #tpu.memory_space<vmem>>, vector<32x128xf32>
    %cst_28 = arith.constant dense<0.000000e+00> : vector<8x128xf32>
    %164 = tpu.matmul %162, %163, %cst_28 {dimension_numbers = #tpu.dot_dimension_numbers<[1], [0], [0], [1], [0, 0, 1, 1], [], []>} : vector<8x32xf32>, vector<32x128xf32>, vector<8x128xf32> -> vector<8x128xf32>
    %c0_29 = arith.constant 0 : index
    %c0_30 = arith.constant 0 : index
    %165 = vector.load %arg6[%c0_29, %c0_30] : memref<1x128xf32, #tpu.memory_space<vmem>>, vector<1x128xf32>
    %166 = vector.broadcast %165 : vector<1x128xf32> to vector<8x128xf32>
    %167 = arith.addf %164, %166 : vector<8x128xf32>
    %cst_31 = arith.constant 0.000000e+00 : f32
    %168 = vector.broadcast %cst_31 : f32 to vector<8x128xf32>
    %169 = arith.maximumf %167, %168 : vector<8x128xf32>
    %c0_32 = arith.constant 0 : index
    %c0_33 = arith.constant 0 : index
    %170 = vector.load %arg7[%c0_32, %c0_33] : memref<8x128xf32, #tpu.memory_space<vmem>>, vector<8x128xf32>
    tpu.vector_store %arg7[%c0_32, %c0_33], %169 {strides = array<i32>} : memref<8x128xf32, #tpu.memory_space<vmem>>, vector<8x128xf32>,
    return
  }
  func.func @transform_0(%arg0: i32) -> (i32, i32, i32) {
    %c0_i32 = arith.constant 0 : i32
    %c0_i32_0 = arith.constant 0 : i32
    %c0_i32_1 = arith.constant 0 : i32
    return %c0_i32, %arg0, %c0_i32_0 : i32, i32, i32
  }
  func.func @transform_1(%arg0: i32) -> (i32, i32) {
    %c0_i32 = arith.constant 0 : i32
    %c0_i32_0 = arith.constant 0 : i32
    %c0_i32_1 = arith.constant 0 : i32
    return %c0_i32, %c0_i32_0 : i32, i32
  }
  func.func @transform_2(%arg0: i32) -> (i32, i32) {
    %c0_i32 = arith.constant 0 : i32
    %c0_i32_0 = arith.constant 0 : i32
    %c0_i32_1 = arith.constant 0 : i32
    return %c0_i32, %c0_i32_0 : i32, i32
  }
  func.func @transform_3(%arg0: i32) -> (i32, i32) {
    %c0_i32 = arith.constant 0 : i32
    %c0_i32_0 = arith.constant 0 : i32
    %c0_i32_1 = arith.constant 0 : i32
    return %c0_i32, %c0_i32_0 : i32, i32
  }
  func.func @transform_4(%arg0: i32) -> (i32, i32) {
    %c0_i32 = arith.constant 0 : i32
    %c0_i32_0 = arith.constant 0 : i32
    %c0_i32_1 = arith.constant 0 : i32
    return %c0_i32, %c0_i32_0 : i32, i32
  }
  func.func @transform_5(%arg0: i32) -> (i32, i32) {
    %c0_i32 = arith.constant 0 : i32
    %c0_i32_0 = arith.constant 0 : i32
    %c0_i32_1 = arith.constant 0 : i32
    return %c0_i32, %c0_i32_0 : i32, i32
  }
  func.func @transform_6(%arg0: i32) -> (i32, i32) {
    %c0_i32 = arith.constant 0 : i32
    %c0_i32_0 = arith.constant 0 : i32
    return %arg0, %c0_i32 : i32, i32
  }
}

</mosaic_0001>

<llo_original>
// kernel: subnet_mt_forward.1
$region0: #{subnet_mt_forward.1}
  #allocation0 [shape = 'u32[]', space=smem, size = 0x4, offset = 0x4, fixed_abs, tag = 'smem constant byte address 0x4 - core index']
  #allocation1 [shape = 'u32[144,128]{1,0:T(1,128)}', space=vmem, size = 0x12000, scoped, tag = 'internal scratch']
  %s0 = inlined_call_operand.vmem [shape: f32[8,8,16], index: 0, kind: input, shape index: {}]
  %s1 = inlined_call_operand.vmem [shape: f32[16,128], index: 1, kind: input, shape index: {}]
  %s2 = inlined_call_operand.vmem [shape: f32[32,128], index: 2, kind: input, shape index: {}]
  %s3 = inlined_call_operand.vmem [shape: f32[1,128], index: 3, kind: input, shape index: {}]
  %s4 = inlined_call_operand.vmem [shape: f32[32,128], index: 4, kind: input, shape index: {}]
  %s5 = inlined_call_operand.vmem [shape: f32[1,128], index: 5, kind: input, shape index: {}]
  %s6 = inlined_call_operand.vmem [shape: f32[8,128], index: 6, kind: output, shape index: {}]
  %s7 = sld [smem:[#allocation0]]
  $region34: #{subnet_mt_forward.1} parent=0
    _
  %s9 = ssub.s32 1, %s7
  %s10 = scalar_select 0, %s9, %s7
  // Predicated region
  $region2: #{subnet_mt_forward.1} parent=0 // pred_check
    _
  $region3: #{subnet_mt_forward.1} parent=0 // pred_check_branch
    %12 = sbr.rel (0) target = $region5
  $region4: #{subnet_mt_forward.1} parent=0 // pred_region
    _
  $region5: #{subnet_mt_forward.1} parent=0 // pred_fallthru
    _
  // Predicated region
  $region6: #{subnet_mt_forward.1} parent=0 // pred_check
    _
  $region7: #{subnet_mt_forward.1} parent=0 // pred_check_branch
    %14 = sbr.rel (0) target = $region9
  $region8: #{subnet_mt_forward.1} parent=0 // pred_region
    _
  $region9: #{subnet_mt_forward.1} parent=0 // pred_fallthru
    _
  // Predicated region
  $region10: #{subnet_mt_forward.1} parent=0 // pred_check
    _
  $region11: #{subnet_mt_forward.1} parent=0 // pred_check_branch
    %16 = sbr.rel (0) target = $region13
  $region12: #{subnet_mt_forward.1} parent=0 // pred_region
    _
  $region13: #{subnet_mt_forward.1} parent=0 // pred_fallthru
    _
  // Predicated region
  $region14: #{subnet_mt_forward.1} parent=0 // pred_check
    _
  $region15: #{subnet_mt_forward.1} parent=0 // pred_check_branch
    %18 = sbr.rel (0) target = $region17
  $region16: #{subnet_mt_forward.1} parent=0 // pred_region
    _
  $region17: #{subnet_mt_forward.1} parent=0 // pred_fallthru
    _
  // Predicated region
  $region18: #{subnet_mt_forward.1} parent=0 // pred_check
    _
  $region19: #{subnet_mt_forward.1} parent=0 // pred_check_branch
    %20 = sbr.rel (0) target = $region21
  $region20: #{subnet_mt_forward.1} parent=0 // pred_region
    _
  $region21: #{subnet_mt_forward.1} parent=0 // pred_fallthru
    _
  // Predicated region
  $region22: #{subnet_mt_forward.1} parent=0 // pred_check
    _
  $region23: #{subnet_mt_forward.1} parent=0 // pred_check_branch
    %22 = sbr.rel (0) target = $region25
  $region24: #{subnet_mt_forward.1} parent=0 // pred_region
    _
  $region25: #{subnet_mt_forward.1} parent=0 // pred_fallthru
    _
  %v23 = vld [vmem:[%s0] sm:$0xff]
  %v24 = vld [vmem:[%s0 + $0x8] sm:$0xff]
  %v25 = vld [vmem:[%s0 + $0x10] sm:$0xff]
  %v26 = vld [vmem:[%s0 + $0x18] sm:$0xff]
  %v27 = vld [vmem:[%s0 + $0x20] sm:$0xff]
  %v28 = vld [vmem:[%s0 + $0x28] sm:$0xff]
  %v29 = vld [vmem:[%s0 + $0x30] sm:$0xff]
  %v30 = vld [vmem:[%s0 + $0x38] sm:$0xff]
  %v31 = vld [vmem:[%s1] sm:$0xff]
  %v32 = vld [vmem:[%s1 + $0x8] sm:$0xff]
  %v33 = vld [vmem:[%s3] sm:$0x1]
  %v35 = vlaneseq
  %v36 = vshrl.u32 %v35, 7
  %v37 = vsub.s32 0, %v36
  %v38 = vrot.slane %v33, %v37
  %vm40 = vcmask 130048
  %v42 = vsel %vm40, %v23, 0
  %v45 = vsel %vm40, %v24, 0
  %v48 = vsel %vm40, %v25, 0
  %v51 = vsel %vm40, %v26, 0
  %v54 = vsel %vm40, %v27, 0
  %v57 = vsel %vm40, %v28, 0
  %v60 = vsel %vm40, %v29, 0
  %v63 = vsel %vm40, %v30, 0
  %65 = vmatprep.subr.mxu0 0.0
  %66 = vmatpush1.msra.mxu0 %v31
  %67 = vmatprep.subr.mxu0 0.0
  %68 = vmatpush1.msra.mxu0 %v32
  %69 = vmatprep.subr.mxu0 0.0
  %70 = vmatpush1.msra.mxu0 0.0
  %71 = vmatprep.subr.mxu0 0.0
  %72 = vmatpush1.msra.mxu0 0.0
  %73 = vmatprep.subr.mxu0 0.0
  %74 = vmatpush1.msra.mxu0 0.0
  %75 = vmatprep.subr.mxu0 0.0
  %76 = vmatpush1.msra.mxu0 0.0
  %77 = vmatprep.subr.mxu0 0.0
  %78 = vmatpush1.msra.mxu0 0.0
  %79 = vmatprep.subr.mxu0 0.0
  %80 = vmatpush1.msra.mxu0 0.0
  %81 = vmatprep.subr.mxu0 0.0
  %82 = vmatpush1.msra.mxu0 0.0
  %83 = vmatprep.subr.mxu0 0.0
  %84 = vmatpush1.msra.mxu0 0.0
  %85 = vmatprep.subr.mxu0 0.0
  %86 = vmatpush1.msra.mxu0 0.0
  %87 = vmatprep.subr.mxu0 0.0
  %88 = vmatpush1.msra.mxu0 0.0
  %89 = vmatprep.subr.mxu0 0.0
  %90 = vmatpush1.msra.mxu0 0.0
  %91 = vmatprep.subr.mxu0 0.0
  %92 = vmatpush1.msra.mxu0 0.0
  %93 = vmatprep.subr.mxu0 0.0
  %94 = vmatpush1.msra.mxu0 0.0
  %95 = vmatprep.subr.mxu0 0.0
  %96 = vmatpush1.msra.mxu0 0.0
  %97 = vmatprep.subr.mxu0 0.0
  %98 = vmatpush1.msra.mxu0 0.0
  %99 = vmatprep.subr.mxu0 0.0
  %100 = vmatpush1.msra.mxu0 0.0
  %101 = vmatprep.subr.mxu0 0.0
  %102 = vmatpush1.msra.mxu0 0.0
  %103 = vmatprep.subr.mxu0 0.0
  %104 = vmatpush1.msra.mxu0 0.0
  %105 = vmatprep.subr.mxu0 0.0
  %106 = vmatpush1.msra.mxu0 0.0
  %107 = vmatprep.subr.mxu0 0.0
  %108 = vmatpush1.msra.mxu0 0.0
  %109 = vmatprep.subr.mxu0 0.0
  %110 = vmatpush1.msra.mxu0 0.0
  %111 = vmatprep.subr.mxu0 0.0
  %112 = vmatpush1.msra.mxu0 0.0
  %113 = vmatprep.subr.mxu0 0.0
  %114 = vmatpush1.msra.mxu0 0.0
  %115 = vmatprep.subr.mxu0 0.0
  %116 = vmatpush1.msra.mxu0 0.0
  %117 = vmatprep.subr.mxu0 0.0
  %118 = vmatpush1.msra.mxu0 0.0
  %119 = vmatprep.subr.mxu0 0.0
  %120 = vmatpush1.msra.mxu0 0.0
  %121 = vmatprep.subr.mxu0 0.0
  %122 = vmatpush1.msra.mxu0 0.0
  %123 = vmatprep.subr.mxu0 0.0
  %124 = vmatpush1.msra.mxu0 0.0
  %125 = vmatprep.subr.mxu0 0.0
  %126 = vmatpush1.msra.mxu0 0.0
  %127 = vmatprep.subr.mxu0 0.0
  %128 = vmatpush1.msra.mxu0 0.0
  %129 = vmatprep.mubr.f32.mxu0 0.0
  %130 = vmatmul.mubr.f32.gmra.mrb[0].mxu0 %v42
  %v131 = vpop.f32.mrb[0].mxu0
  %v132 = vadd.f32 %v38, %v131
  %v133 = vpop.f32.mrb[0].mxu0
  %134 = vmatprep.mubr.f32.mxu0 0.0
  %135 = vmatmul.mubr.f32.gmra.mrb[0].mxu0 %v45
  %v136 = vpop.f32.mrb[0].mxu0
  %v137 = vadd.f32 %v38, %v136
  %v138 = vpop.f32.mrb[0].mxu0
  %139 = vmatprep.mubr.f32.mxu0 0.0
  %140 = vmatmul.mubr.f32.gmra.mrb[0].mxu0 %v48
  %v141 = vpop.f32.mrb[0].mxu0
  %v142 = vadd.f32 %v38, %v141
  %v143 = vpop.f32.mrb[0].mxu0
  %144 = vmatprep.mubr.f32.mxu0 0.0
  %145 = vmatmul.mubr.f32.gmra.mrb[0].mxu0 %v51
  %v146 = vpop.f32.mrb[0].mxu0
  %v147 = vadd.f32 %v38, %v146
  %v148 = vpop.f32.mrb[0].mxu0
  %149 = vmatprep.mubr.f32.mxu0 0.0
  %150 = vmatmul.mubr.f32.gmra.mrb[0].mxu0 %v54
  %v151 = vpop.f32.mrb[0].mxu0
  %v152 = vadd.f32 %v38, %v151
  %v153 = vpop.f32.mrb[0].mxu0
  %154 = vmatprep.mubr.f32.mxu0 0.0
  %155 = vmatmul.mubr.f32.gmra.mrb[0].mxu0 %v57
  %v156 = vpop.f32.mrb[0].mxu0
  %v157 = vadd.f32 %v38, %v156
  %v158 = vpop.f32.mrb[0].mxu0
  %159 = vmatprep.mubr.f32.mxu0 0.0
  %160 = vmatmul.mubr.f32.gmra.mrb[0].mxu0 %v60
  %v161 = vpop.f32.mrb[0].mxu0
  %v162 = vadd.f32 %v38, %v161
  %v163 = vpop.f32.mrb[0].mxu0
  %164 = vmatprep.mubr.f32.mxu0 0.0
  %165 = vmatmul.mubr.f32.gmra.mrb[0].mxu0 %v63
  %v166 = vpop.f32.mrb[0].mxu0
  %v167 = vadd.f32 %v38, %v166
  %v168 = vpop.f32.mrb[0].mxu0
  %169 = vdwg.mxu0
  %v170 = vld [vmem:[%s2] sm:$0xff]
  %v171 = vld [vmem:[%s2 + $0x8] sm:$0xff]
  %v172 = vld [vmem:[%s2 + $0x10] sm:$0xff]
  %v173 = vld [vmem:[%s2 + $0x18] sm:$0xff]
  %vm174 = vcmask 261120
  %v176 = vsel %vm174, 0.0, 0
  %178 = vmatprep.subr.mxu0 0.0
  %179 = vmatpush1.msra.mxu0 %v170
  %180 = vmatprep.subr.mxu0 0.0
  %181 = vmatpush1.msra.mxu0 %v171
  %182 = vmatprep.subr.mxu0 0.0
  %183 = vmatpush1.msra.mxu0 %v172
  %184 = vmatprep.subr.mxu0 0.0
  %185 = vmatpush1.msra.mxu0 %v173
  %186 = vmatprep.subr.mxu0 0.0
  %187 = vmatpush1.msra.mxu0 0.0
  %188 = vmatprep.subr.mxu0 0.0
  %189 = vmatpush1.msra.mxu0 0.0
  %190 = vmatprep.subr.mxu0 0.0
  %191 = vmatpush1.msra.mxu0 0.0
  %192 = vmatprep.subr.mxu0 0.0
  %193 = vmatpush1.msra.mxu0 0.0
  %194 = vmatprep.subr.mxu0 0.0
  %195 = vmatpush1.msra.mxu0 0.0
  %196 = vmatprep.subr.mxu0 0.0
  %197 = vmatpush1.msra.mxu0 0.0
  %198 = vmatprep.subr.mxu0 0.0
  %199 = vmatpush1.msra.mxu0 0.0
  %200 = vmatprep.subr.mxu0 0.0
  %201 = vmatpush1.msra.mxu0 0.0
  %202 = vmatprep.subr.mxu0 0.0
  %203 = vmatpush1.msra.mxu0 0.0
  %204 = vmatprep.subr.mxu0 0.0
  %205 = vmatpush1.msra.mxu0 0.0
  %206 = vmatprep.subr.mxu0 0.0
  %207 = vmatpush1.msra.mxu0 0.0
  %208 = vmatprep.subr.mxu0 0.0
  %209 = vmatpush1.msra.mxu0 0.0
  %210 = vmatprep.subr.mxu0 0.0
  %211 = vmatpush1.msra.mxu0 0.0
  %212 = vmatprep.subr.mxu0 0.0
  %213 = vmatpush1.msra.mxu0 0.0
  %214 = vmatprep.subr.mxu0 0.0
  %215 = vmatpush1.msra.mxu0 0.0
  %216 = vmatprep.subr.mxu0 0.0
  %217 = vmatpush1.msra.mxu0 0.0
  %218 = vmatprep.subr.mxu0 0.0
  %219 = vmatpush1.msra.mxu0 0.0
  %220 = vmatprep.subr.mxu0 0.0
  %221 = vmatpush1.msra.mxu0 0.0
  %222 = vmatprep.subr.mxu0 0.0
  %223 = vmatpush1.msra.mxu0 0.0
  %224 = vmatprep.subr.mxu0 0.0
  %225 = vmatpush1.msra.mxu0 0.0
  %226 = vmatprep.subr.mxu0 0.0
  %227 = vmatpush1.msra.mxu0 0.0
  %228 = vmatprep.subr.mxu0 0.0
  %229 = vmatpush1.msra.mxu0 0.0
  %230 = vmatprep.subr.mxu0 0.0
  %231 = vmatpush1.msra.mxu0 0.0
  %232 = vmatprep.subr.mxu0 0.0
  %233 = vmatpush1.msra.mxu0 0.0
  %234 = vmatprep.subr.mxu0 0.0
  %235 = vmatpush1.msra.mxu0 0.0
  %236 = vmatprep.subr.mxu0 0.0
  %237 = vmatpush1.msra.mxu0 0.0
  %238 = vmatprep.subr.mxu0 0.0
  %239 = vmatpush1.msra.mxu0 0.0
  %240 = vmatprep.subr.mxu0 0.0
  %241 = vmatpush1.msra.mxu0 0.0
  %242 = vmatprep.mubr.f32.mxu0 0.0
  %243 = vmatmul.mubr.f32.gmra.mrb[0].mxu0 %v176
  %v244 = vpop.f32.mrb[0].mxu0
  %v245 = vadd.f32 0.0, %v244
  %v246 = vpop.f32.mrb[0].mxu0
  %247 = vdwg.mxu0
  %v248 = vadd.f32 %v132, %v245
  %v249 = vxor.u32 %v248, 2147483648
  %v250 = vmul.f32 %v249, 1.442695
  %v251 = vpow.pop %v250
  %v252 = vadd.f32 %v251, 1.0
  %v253 = vrcp.pop %v252
  %v254 = vmul.f32 1.0, %v253
  %v255 = vtanh.pop %v248
  %v256 = vmul.f32 %v254, 0.0
  %258 = vrot.lane.b32.xlu0 %v255, 64
  %v259 = vpop.permute.xlu0 %258
  %v261 = vmul.f32 %v254, %v259
  %263 = vrot.lane.b32.xlu0 %v261, 32
  %v264 = vpop.permute.xlu0 %263
  %v266 = vadd.f32 %v256, %v264
  %v267 = vtanh.pop %v266
  %269 = vrot.lane.b32.xlu0 %v267, 64
  %v270 = vpop.permute.xlu0 %269
  %v272 = vmul.f32 %v254, %v270
  %274 = vrot.lane.b32.xlu0 %v272, 32
  %v275 = vpop.permute.xlu0 %274
  %v276 = vsel %vm174, %v275, 0
  %278 = vmatprep.subr.mxu0 0.0
  %279 = vmatpush1.msra.mxu0 %v170
  %280 = vmatprep.subr.mxu0 0.0
  %281 = vmatpush1.msra.mxu0 %v171
  %282 = vmatprep.subr.mxu0 0.0
  %283 = vmatpush1.msra.mxu0 %v172
  %284 = vmatprep.subr.mxu0 0.0
  %285 = vmatpush1.msra.mxu0 %v173
  %286 = vmatprep.subr.mxu0 0.0
  %287 = vmatpush1.msra.mxu0 0.0
  %288 = vmatprep.subr.mxu0 0.0
  %289 = vmatpush1.msra.mxu0 0.0
  %290 = vmatprep.subr.mxu0 0.0
  %291 = vmatpush1.msra.mxu0 0.0
  %292 = vmatprep.subr.mxu0 0.0
  %293 = vmatpush1.msra.mxu0 0.0
  %294 = vmatprep.subr.mxu0 0.0
  %295 = vmatpush1.msra.mxu0 0.0
  %296 = vmatprep.subr.mxu0 0.0
  %297 = vmatpush1.msra.mxu0 0.0
  %298 = vmatprep.subr.mxu0 0.0
  %299 = vmatpush1.msra.mxu0 0.0
  %300 = vmatprep.subr.mxu0 0.0
  %301 = vmatpush1.msra.mxu0 0.0
  %302 = vmatprep.subr.mxu0 0.0
  %303 = vmatpush1.msra.mxu0 0.0
  %304 = vmatprep.subr.mxu0 0.0
  %305 = vmatpush1.msra.mxu0 0.0
  %306 = vmatprep.subr.mxu0 0.0
  %307 = vmatpush1.msra.mxu0 0.0
  %308 = vmatprep.subr.mxu0 0.0
  %309 = vmatpush1.msra.mxu0 0.0
  %310 = vmatprep.subr.mxu0 0.0
  %311 = vmatpush1.msra.mxu0 0.0
  %312 = vmatprep.subr.mxu0 0.0
  %313 = vmatpush1.msra.mxu0 0.0
  %314 = vmatprep.subr.mxu0 0.0
  %315 = vmatpush1.msra.mxu0 0.0
  %316 = vmatprep.subr.mxu0 0.0
  %317 = vmatpush1.msra.mxu0 0.0
  %318 = vmatprep.subr.mxu0 0.0
  %319 = vmatpush1.msra.mxu0 0.0
  %320 = vmatprep.subr.mxu0 0.0
  %321 = vmatpush1.msra.mxu0 0.0
  %322 = vmatprep.subr.mxu0 0.0
  %323 = vmatpush1.msra.mxu0 0.0
  %324 = vmatprep.subr.mxu0 0.0
  %325 = vmatpush1.msra.mxu0 0.0
  %326 = vmatprep.subr.mxu0 0.0
  %327 = vmatpush1.msra.mxu0 0.0
  %328 = vmatprep.subr.mxu0 0.0
  %329 = vmatpush1.msra.mxu0 0.0
  %330 = vmatprep.subr.mxu0 0.0
  %331 = vmatpush1.msra.mxu0 0.0
  %332 = vmatprep.subr.mxu0 0.0
  %333 = vmatpush1.msra.mxu0 0.0
  %334 = vmatprep.subr.mxu0 0.0
  %335 = vmatpush1.msra.mxu0 0.0
  %336 = vmatprep.subr.mxu0 0.0
  %337 = vmatpush1.msra.mxu0 0.0
  %338 = vmatprep.subr.mxu0 0.0
  %339 = vmatpush1.msra.mxu0 0.0
  %340 = vmatprep.subr.mxu0 0.0
  %341 = vmatpush1.msra.mxu0 0.0
  %342 = vmatprep.mubr.f32.mxu0 0.0
  %343 = vmatmul.mubr.f32.gmra.mrb[0].mxu0 %v276
  %v344 = vpop.f32.mrb[0].mxu0
  %v345 = vadd.f32 0.0, %v344
  %v346 = vpop.f32.mrb[0].mxu0
  %347 = vdwg.mxu0
  %v348 = vadd.f32 %v137, %v345
  %v349 = vxor.u32 %v348, 2147483648
  %v350 = vmul.f32 %v349, 1.442695
  %v351 = vpow.pop %v350
  %v352 = vadd.f32 %v351, 1.0
  %v353 = vrcp.pop %v352
  %v354 = vmul.f32 1.0, %v353
  %v355 = vtanh.pop %v348
  %v356 = vmul.f32 %v354, %v266
  %358 = vrot.lane.b32.xlu0 %v355, 64
  %v359 = vpop.permute.xlu0 %358
  %v361 = vmul.f32 %v354, %v359
  %363 = vrot.lane.b32.xlu0 %v361, 32
  %v364 = vpop.permute.xlu0 %363
  %v366 = vadd.f32 %v356, %v364
  %v367 = vtanh.pop %v366
  %369 = vrot.lane.b32.xlu0 %v367, 64
  %v370 = vpop.permute.xlu0 %369
  %v372 = vmul.f32 %v354, %v370
  %374 = vrot.lane.b32.xlu0 %v372, 32
  %v375 = vpop.permute.xlu0 %374
  %v376 = vsel %vm174, %v375, 0
  %378 = vmatprep.subr.mxu0 0.0
  %379 = vmatpush1.msra.mxu0 %v170
  %380 = vmatprep.subr.mxu0 0.0
  %381 = vmatpush1.msra.mxu0 %v171
  %382 = vmatprep.subr.mxu0 0.0
  %383 = vmatpush1.msra.mxu0 %v172
  %384 = vmatprep.subr.mxu0 0.0
  %385 = vmatpush1.msra.mxu0 %v173
  %386 = vmatprep.subr.mxu0 0.0
  %387 = vmatpush1.msra.mxu0 0.0
  %388 = vmatprep.subr.mxu0 0.0
  %389 = vmatpush1.msra.mxu0 0.0
  %390 = vmatprep.subr.mxu0 0.0
  %391 = vmatpush1.msra.mxu0 0.0
  %392 = vmatprep.subr.mxu0 0.0
  %393 = vmatpush1.msra.mxu0 0.0
  %394 = vmatprep.subr.mxu0 0.0
  %395 = vmatpush1.msra.mxu0 0.0
  %396 = vmatprep.subr.mxu0 0.0
  %397 = vmatpush1.msra.mxu0 0.0
  %398 = vmatprep.subr.mxu0 0.0
  %399 = vmatpush1.msra.mxu0 0.0
  %400 = vmatprep.subr.mxu0 0.0
  %401 = vmatpush1.msra.mxu0 0.0
  %402 = vmatprep.subr.mxu0 0.0
  %403 = vmatpush1.msra.mxu0 0.0
  %404 = vmatprep.subr.mxu0 0.0
  %405 = vmatpush1.msra.mxu0 0.0
  %406 = vmatprep.subr.mxu0 0.0
  %407 = vmatpush1.msra.mxu0 0.0
  %408 = vmatprep.subr.mxu0 0.0
  %409 = vmatpush1.msra.mxu0 0.0
  %410 = vmatprep.subr.mxu0 0.0
  %411 = vmatpush1.msra.mxu0 0.0
  %412 = vmatprep.subr.mxu0 0.0
  %413 = vmatpush1.msra.mxu0 0.0
  %414 = vmatprep.subr.mxu0 0.0
  %415 = vmatpush1.msra.mxu0 0.0
  %416 = vmatprep.subr.mxu0 0.0
  %417 = vmatpush1.msra.mxu0 0.0
  %418 = vmatprep.subr.mxu0 0.0
  %419 = vmatpush1.msra.mxu0 0.0
  %420 = vmatprep.subr.mxu0 0.0
  %421 = vmatpush1.msra.mxu0 0.0
  %422 = vmatprep.subr.mxu0 0.0
  %423 = vmatpush1.msra.mxu0 0.0
  %424 = vmatprep.subr.mxu0 0.0
  %425 = vmatpush1.msra.mxu0 0.0
  %426 = vmatprep.subr.mxu0 0.0
  %427 = vmatpush1.msra.mxu0 0.0
  %428 = vmatprep.subr.mxu0 0.0
  %429 = vmatpush1.msra.mxu0 0.0
  %430 = vmatprep.subr.mxu0 0.0
  %431 = vmatpush1.msra.mxu0 0.0
  %432 = vmatprep.subr.mxu0 0.0
  %433 = vmatpush1.msra.mxu0 0.0
  %434 = vmatprep.subr.mxu0 0.0
  %435 = vmatpush1.msra.mxu0 0.0
  %436 = vmatprep.subr.mxu0 0.0
  %437 = vmatpush1.msra.mxu0 0.0
  %438 = vmatprep.subr.mxu0 0.0
  %439 = vmatpush1.msra.mxu0 0.0
  %440 = vmatprep.subr.mxu0 0.0
  %441 = vmatpush1.msra.mxu0 0.0
  %442 = vmatprep.mubr.f32.mxu0 0.0
  %443 = vmatmul.mubr.f32.gmra.mrb[0].mxu0 %v376
  %v444 = vpop.f32.mrb[0].mxu0
  %v445 = vadd.f32 0.0, %v444
  %v446 = vpop.f32.mrb[0].mxu0
  %447 = vdwg.mxu0
  %v448 = vadd.f32 %v142, %v445
  %v449 = vxor.u32 %v448, 2147483648
  %v450 = vmul.f32 %v449, 1.442695
  %v451 = vpow.pop %v450
  %v452 = vadd.f32 %v451, 1.0
  %v453 = vrcp.pop %v452
  %v454 = vmul.f32 1.0, %v453
  %v455 = vtanh.pop %v448
  %v456 = vmul.f32 %v454, %v366
  %458 = vrot.lane.b32.xlu0 %v455, 64
  %v459 = vpop.permute.xlu0 %458
  %v461 = vmul.f32 %v454, %v459
  %463 = vrot.lane.b32.xlu0 %v461, 32
  %v464 = vpop.permute.xlu0 %463
  %v466 = vadd.f32 %v456, %v464
  %v467 = vtanh.pop %v466
  %469 = vrot.lane.b32.xlu0 %v467, 64
  %v470 = vpop.permute.xlu0 %469
  %v472 = vmul.f32 %v454, %v470
  %474 = vrot.lane.b32.xlu0 %v472, 32
  %v475 = vpop.permute.xlu0 %474
  %v476 = vsel %vm174, %v475, 0
  %478 = vmatprep.subr.mxu0 0.0
  %479 = vmatpush1.msra.mxu0 %v170
  %480 = vmatprep.subr.mxu0 0.0
  %481 = vmatpush1.msra.mxu0 %v171
  %482 = vmatprep.subr.mxu0 0.0
  %483 = vmatpush1.msra.mxu0 %v172
  %484 = vmatprep.subr.mxu0 0.0
  %485 = vmatpush1.msra.mxu0 %v173
  %486 = vmatprep.subr.mxu0 0.0
  %487 = vmatpush1.msra.mxu0 0.0
  %488 = vmatprep.subr.mxu0 0.0
  %489 = vmatpush1.msra.mxu0 0.0
  %490 = vmatprep.subr.mxu0 0.0
  %491 = vmatpush1.msra.mxu0 0.0
  %492 = vmatprep.subr.mxu0 0.0
  %493 = vmatpush1.msra.mxu0 0.0
  %494 = vmatprep.subr.mxu0 0.0
  %495 = vmatpush1.msra.mxu0 0.0
  %496 = vmatprep.subr.mxu0 0.0
  %497 = vmatpush1.msra.mxu0 0.0
  %498 = vmatprep.subr.mxu0 0.0
  %499 = vmatpush1.msra.mxu0 0.0
  %500 = vmatprep.subr.mxu0 0.0
  %501 = vmatpush1.msra.mxu0 0.0
  %502 = vmatprep.subr.mxu0 0.0
  %503 = vmatpush1.msra.mxu0 0.0
  %504 = vmatprep.subr.mxu0 0.0
  %505 = vmatpush1.msra.mxu0 0.0
  %506 = vmatprep.subr.mxu0 0.0
  %507 = vmatpush1.msra.mxu0 0.0
  %508 = vmatprep.subr.mxu0 0.0
  %509 = vmatpush1.msra.mxu0 0.0
  %510 = vmatprep.subr.mxu0 0.0
  %511 = vmatpush1.msra.mxu0 0.0
  %512 = vmatprep.subr.mxu0 0.0
  %513 = vmatpush1.msra.mxu0 0.0
  %514 = vmatprep.subr.mxu0 0.0
  %515 = vmatpush1.msra.mxu0 0.0
  %516 = vmatprep.subr.mxu0 0.0
  %517 = vmatpush1.msra.mxu0 0.0
  %518 = vmatprep.subr.mxu0 0.0
  %519 = vmatpush1.msra.mxu0 0.0
  %520 = vmatprep.subr.mxu0 0.0
  %521 = vmatpush1.msra.mxu0 0.0
  %522 = vmatprep.subr.mxu0 0.0
  %523 = vmatpush1.msra.mxu0 0.0
  %524 = vmatprep.subr.mxu0 0.0
  %525 = vmatpush1.msra.mxu0 0.0
  %526 = vmatprep.subr.mxu0 0.0
  %527 = vmatpush1.msra.mxu0 0.0
  %528 = vmatprep.subr.mxu0 0.0
  %529 = vmatpush1.msra.mxu0 0.0
  %530 = vmatprep.subr.mxu0 0.0
  %531 = vmatpush1.msra.mxu0 0.0
  %532 = vmatprep.subr.mxu0 0.0
  %533 = vmatpush1.msra.mxu0 0.0
  %534 = vmatprep.subr.mxu0 0.0
  %535 = vmatpush1.msra.mxu0 0.0
  %536 = vmatprep.subr.mxu0 0.0
  %537 = vmatpush1.msra.mxu0 0.0
  %538 = vmatprep.subr.mxu0 0.0
  %539 = vmatpush1.msra.mxu0 0.0
  %540 = vmatprep.subr.mxu0 0.0
  %541 = vmatpush1.msra.mxu0 0.0
  %542 = vmatprep.mubr.f32.mxu0 0.0
  %543 = vmatmul.mubr.f32.gmra.mrb[0].mxu0 %v476
  %v544 = vpop.f32.mrb[0].mxu0
  %v545 = vadd.f32 0.0, %v544
  %v546 = vpop.f32.mrb[0].mxu0
  %547 = vdwg.mxu0
  %v548 = vadd.f32 %v147, %v545
  %v549 = vxor.u32 %v548, 2147483648
  %v550 = vmul.f32 %v549, 1.442695
  %v551 = vpow.pop %v550
  %v552 = vadd.f32 %v551, 1.0
  %v553 = vrcp.pop %v552
  %v554 = vmul.f32 1.0, %v553
  %v555 = vtanh.pop %v548
  %v556 = vmul.f32 %v554, %v466
  %558 = vrot.lane.b32.xlu0 %v555, 64
  %v559 = vpop.permute.xlu0 %558
  %v561 = vmul.f32 %v554, %v559
  %563 = vrot.lane.b32.xlu0 %v561, 32
  %v564 = vpop.permute.xlu0 %563
  %v566 = vadd.f32 %v556, %v564
  %v567 = vtanh.pop %v566
  %569 = vrot.lane.b32.xlu0 %v567, 64
  %v570 = vpop.permute.xlu0 %569
  %v572 = vmul.f32 %v554, %v570
  %574 = vrot.lane.b32.xlu0 %v572, 32
  %v575 = vpop.permute.xlu0 %574
  %v576 = vsel %vm174, %v575, 0
  %578 = vmatprep.subr.mxu0 0.0
  %579 = vmatpush1.msra.mxu0 %v170
  %580 = vmatprep.subr.mxu0 0.0
  %581 = vmatpush1.msra.mxu0 %v171
  %582 = vmatprep.subr.mxu0 0.0
  %583 = vmatpush1.msra.mxu0 %v172
  %584 = vmatprep.subr.mxu0 0.0
  %585 = vmatpush1.msra.mxu0 %v173
  %586 = vmatprep.subr.mxu0 0.0
  %587 = vmatpush1.msra.mxu0 0.0
  %588 = vmatprep.subr.mxu0 0.0
  %589 = vmatpush1.msra.mxu0 0.0
  %590 = vmatprep.subr.mxu0 0.0
  %591 = vmatpush1.msra.mxu0 0.0
  %592 = vmatprep.subr.mxu0 0.0
  %593 = vmatpush1.msra.mxu0 0.0
  %594 = vmatprep.subr.mxu0 0.0
  %595 = vmatpush1.msra.mxu0 0.0
  %596 = vmatprep.subr.mxu0 0.0
  %597 = vmatpush1.msra.mxu0 0.0
  %598 = vmatprep.subr.mxu0 0.0
  %599 = vmatpush1.msra.mxu0 0.0
  %600 = vmatprep.subr.mxu0 0.0
  %601 = vmatpush1.msra.mxu0 0.0
  %602 = vmatprep.subr.mxu0 0.0
  %603 = vmatpush1.msra.mxu0 0.0
  %604 = vmatprep.subr.mxu0 0.0
  %605 = vmatpush1.msra.mxu0 0.0
  %606 = vmatprep.subr.mxu0 0.0
  %607 = vmatpush1.msra.mxu0 0.0
  %608 = vmatprep.subr.mxu0 0.0
  %609 = vmatpush1.msra.mxu0 0.0
  %610 = vmatprep.subr.mxu0 0.0
  %611 = vmatpush1.msra.mxu0 0.0
  %612 = vmatprep.subr.mxu0 0.0
  %613 = vmatpush1.msra.mxu0 0.0
  %614 = vmatprep.subr.mxu0 0.0
  %615 = vmatpush1.msra.mxu0 0.0
  %616 = vmatprep.subr.mxu0 0.0
  %617 = vmatpush1.msra.mxu0 0.0
  %618 = vmatprep.subr.mxu0 0.0
  %619 = vmatpush1.msra.mxu0 0.0
  %620 = vmatprep.subr.mxu0 0.0
  %621 = vmatpush1.msra.mxu0 0.0
  %622 = vmatprep.subr.mxu0 0.0
  %623 = vmatpush1.msra.mxu0 0.0
  %624 = vmatprep.subr.mxu0 0.0
  %625 = vmatpush1.msra.mxu0 0.0
  %626 = vmatprep.subr.mxu0 0.0
  %627 = vmatpush1.msra.mxu0 0.0
  %628 = vmatprep.subr.mxu0 0.0
  %629 = vmatpush1.msra.mxu0 0.0
  %630 = vmatprep.subr.mxu0 0.0
  %631 = vmatpush1.msra.mxu0 0.0
  %632 = vmatprep.subr.mxu0 0.0
  %633 = vmatpush1.msra.mxu0 0.0
  %634 = vmatprep.subr.mxu0 0.0
  %635 = vmatpush1.msra.mxu0 0.0
  %636 = vmatprep.subr.mxu0 0.0
  %637 = vmatpush1.msra.mxu0 0.0
  %638 = vmatprep.subr.mxu0 0.0
  %639 = vmatpush1.msra.mxu0 0.0
  %640 = vmatprep.subr.mxu0 0.0
  %641 = vmatpush1.msra.mxu0 0.0
  %642 = vmatprep.mubr.f32.mxu0 0.0
  %643 = vmatmul.mubr.f32.gmra.mrb[0].mxu0 %v576
  %v644 = vpop.f32.mrb[0].mxu0
  %v645 = vadd.f32 0.0, %v644
  %v646 = vpop.f32.mrb[0].mxu0
  %647 = vdwg.mxu0
  %v648 = vadd.f32 %v152, %v645
  %v649 = vxor.u32 %v648, 2147483648
  %v650 = vmul.f32 %v649, 1.442695
  %v651 = vpow.pop %v650
  %v652 = vadd.f32 %v651, 1.0
  %v653 = vrcp.pop %v652
  %v654 = vmul.f32 1.0, %v653
  %v655 = vtanh.pop %v648
  %v656 = vmul.f32 %v654, %v566
  %658 = vrot.lane.b32.xlu0 %v655, 64
  %v659 = vpop.permute.xlu0 %658
  %v661 = vmul.f32 %v654, %v659
  %663 = vrot.lane.b32.xlu0 %v661, 32
  %v664 = vpop.permute.xlu0 %663
  %v666 = vadd.f32 %v656, %v664
  %v667 = vtanh.pop %v666
  %669 = vrot.lane.b32.xlu0 %v667, 64
  %v670 = vpop.permute.xlu0 %669
  %v672 = vmul.f32 %v654, %v670
  %674 = vrot.lane.b32.xlu0 %v672, 32
  %v675 = vpop.permute.xlu0 %674
  %v676 = vsel %vm174, %v675, 0
  %678 = vmatprep.subr.mxu0 0.0
  %679 = vmatpush1.msra.mxu0 %v170
  %680 = vmatprep.subr.mxu0 0.0
  %681 = vmatpush1.msra.mxu0 %v171
  %682 = vmatprep.subr.mxu0 0.0
  %683 = vmatpush1.msra.mxu0 %v172
  %684 = vmatprep.subr.mxu0 0.0
  %685 = vmatpush1.msra.mxu0 %v173
  %686 = vmatprep.subr.mxu0 0.0
  %687 = vmatpush1.msra.mxu0 0.0
  %688 = vmatprep.subr.mxu0 0.0
  %689 = vmatpush1.msra.mxu0 0.0
  %690 = vmatprep.subr.mxu0 0.0
  %691 = vmatpush1.msra.mxu0 0.0
  %692 = vmatprep.subr.mxu0 0.0
  %693 = vmatpush1.msra.mxu0 0.0
  %694 = vmatprep.subr.mxu0 0.0
  %695 = vmatpush1.msra.mxu0 0.0
  %696 = vmatprep.subr.mxu0 0.0
  %697 = vmatpush1.msra.mxu0 0.0
  %698 = vmatprep.subr.mxu0 0.0
  %699 = vmatpush1.msra.mxu0 0.0
  %700 = vmatprep.subr.mxu0 0.0
  %701 = vmatpush1.msra.mxu0 0.0
  %702 = vmatprep.subr.mxu0 0.0
  %703 = vmatpush1.msra.mxu0 0.0
  %704 = vmatprep.subr.mxu0 0.0
  %705 = vmatpush1.msra.mxu0 0.0
  %706 = vmatprep.subr.mxu0 0.0
  %707 = vmatpush1.msra.mxu0 0.0
  %708 = vmatprep.subr.mxu0 0.0
  %709 = vmatpush1.msra.mxu0 0.0
  %710 = vmatprep.subr.mxu0 0.0
  %711 = vmatpush1.msra.mxu0 0.0
  %712 = vmatprep.subr.mxu0 0.0
  %713 = vmatpush1.msra.mxu0 0.0
  %714 = vmatprep.subr.mxu0 0.0
  %715 = vmatpush1.msra.mxu0 0.0
  %716 = vmatprep.subr.mxu0 0.0
  %717 = vmatpush1.msra.mxu0 0.0
  %718 = vmatprep.subr.mxu0 0.0
  %719 = vmatpush1.msra.mxu0 0.0
  %720 = vmatprep.subr.mxu0 0.0
  %721 = vmatpush1.msra.mxu0 0.0
  %722 = vmatprep.subr.mxu0 0.0
  %723 = vmatpush1.msra.mxu0 0.0
  %724 = vmatprep.subr.mxu0 0.0
  %725 = vmatpush1.msra.mxu0 0.0
  %726 = vmatprep.subr.mxu0 0.0
  %727 = vmatpush1.msra.mxu0 0.0
  %728 = vmatprep.subr.mxu0 0.0
  %729 = vmatpush1.msra.mxu0 0.0
  %730 = vmatprep.subr.mxu0 0.0
  %731 = vmatpush1.msra.mxu0 0.0
  %732 = vmatprep.subr.mxu0 0.0
  %733 = vmatpush1.msra.mxu0 0.0
  %734 = vmatprep.subr.mxu0 0.0
  %735 = vmatpush1.msra.mxu0 0.0
  %736 = vmatprep.subr.mxu0 0.0
  %737 = vmatpush1.msra.mxu0 0.0
  %738 = vmatprep.subr.mxu0 0.0
  %739 = vmatpush1.msra.mxu0 0.0
  %740 = vmatprep.subr.mxu0 0.0
  %741 = vmatpush1.msra.mxu0 0.0
  %742 = vmatprep.mubr.f32.mxu0 0.0
  %743 = vmatmul.mubr.f32.gmra.mrb[0].mxu0 %v676
  %v744 = vpop.f32.mrb[0].mxu0
  %v745 = vadd.f32 0.0, %v744
  %v746 = vpop.f32.mrb[0].mxu0
  %747 = vdwg.mxu0
  %v748 = vadd.f32 %v157, %v745
  %v749 = vxor.u32 %v748, 2147483648
  %v750 = vmul.f32 %v749, 1.442695
  %v751 = vpow.pop %v750
  %v752 = vadd.f32 %v751, 1.0
  %v753 = vrcp.pop %v752
  %v754 = vmul.f32 1.0, %v753
  %v755 = vtanh.pop %v748
  %v756 = vmul.f32 %v754, %v666
  %758 = vrot.lane.b32.xlu0 %v755, 64
  %v759 = vpop.permute.xlu0 %758
  %v761 = vmul.f32 %v754, %v759
  %763 = vrot.lane.b32.xlu0 %v761, 32
  %v764 = vpop.permute.xlu0 %763
  %v766 = vadd.f32 %v756, %v764
  %v767 = vtanh.pop %v766
  %769 = vrot.lane.b32.xlu0 %v767, 64
  %v770 = vpop.permute.xlu0 %769
  %v772 = vmul.f32 %v754, %v770
  %774 = vrot.lane.b32.xlu0 %v772, 32
  %v775 = vpop.permute.xlu0 %774
  %v776 = vsel %vm174, %v775, 0
  %778 = vmatprep.subr.mxu0 0.0
  %779 = vmatpush1.msra.mxu0 %v170
  %780 = vmatprep.subr.mxu0 0.0
  %781 = vmatpush1.msra.mxu0 %v171
  %782 = vmatprep.subr.mxu0 0.0
  %783 = vmatpush1.msra.mxu0 %v172
  %784 = vmatprep.subr.mxu0 0.0
  %785 = vmatpush1.msra.mxu0 %v173
  %786 = vmatprep.subr.mxu0 0.0
  %787 = vmatpush1.msra.mxu0 0.0
  %788 = vmatprep.subr.mxu0 0.0
  %789 = vmatpush1.msra.mxu0 0.0
  %790 = vmatprep.subr.mxu0 0.0
  %791 = vmatpush1.msra.mxu0 0.0
  %792 = vmatprep.subr.mxu0 0.0
  %793 = vmatpush1.msra.mxu0 0.0
  %794 = vmatprep.subr.mxu0 0.0
  %795 = vmatpush1.msra.mxu0 0.0
  %796 = vmatprep.subr.mxu0 0.0
  %797 = vmatpush1.msra.mxu0 0.0
  %798 = vmatprep.subr.mxu0 0.0
  %799 = vmatpush1.msra.mxu0 0.0
  %800 = vmatprep.subr.mxu0 0.0
  %801 = vmatpush1.msra.mxu0 0.0
  %802 = vmatprep.subr.mxu0 0.0
  %803 = vmatpush1.msra.mxu0 0.0
  %804 = vmatprep.subr.mxu0 0.0
  %805 = vmatpush1.msra.mxu0 0.0
  %806 = vmatprep.subr.mxu0 0.0
  %807 = vmatpush1.msra.mxu0 0.0
  %808 = vmatprep.subr.mxu0 0.0
  %809 = vmatpush1.msra.mxu0 0.0
  %810 = vmatprep.subr.mxu0 0.0
  %811 = vmatpush1.msra.mxu0 0.0
  %812 = vmatprep.subr.mxu0 0.0
  %813 = vmatpush1.msra.mxu0 0.0
  %814 = vmatprep.subr.mxu0 0.0
  %815 = vmatpush1.msra.mxu0 0.0
  %816 = vmatprep.subr.mxu0 0.0
  %817 = vmatpush1.msra.mxu0 0.0
  %818 = vmatprep.subr.mxu0 0.0
  %819 = vmatpush1.msra.mxu0 0.0
  %820 = vmatprep.subr.mxu0 0.0
  %821 = vmatpush1.msra.mxu0 0.0
  %822 = vmatprep.subr.mxu0 0.0
  %823 = vmatpush1.msra.mxu0 0.0
  %824 = vmatprep.subr.mxu0 0.0
  %825 = vmatpush1.msra.mxu0 0.0
  %826 = vmatprep.subr.mxu0 0.0
  %827 = vmatpush1.msra.mxu0 0.0
  %828 = vmatprep.subr.mxu0 0.0
  %829 = vmatpush1.msra.mxu0 0.0
  %830 = vmatprep.subr.mxu0 0.0
  %831 = vmatpush1.msra.mxu0 0.0
  %832 = vmatprep.subr.mxu0 0.0
  %833 = vmatpush1.msra.mxu0 0.0
  %834 = vmatprep.subr.mxu0 0.0
  %835 = vmatpush1.msra.mxu0 0.0
  %836 = vmatprep.subr.mxu0 0.0
  %837 = vmatpush1.msra.mxu0 0.0
  %838 = vmatprep.subr.mxu0 0.0
  %839 = vmatpush1.msra.mxu0 0.0
  %840 = vmatprep.subr.mxu0 0.0
  %841 = vmatpush1.msra.mxu0 0.0
  %842 = vmatprep.mubr.f32.mxu0 0.0
  %843 = vmatmul.mubr.f32.gmra.mrb[0].mxu0 %v776
  %v844 = vpop.f32.mrb[0].mxu0
  %v845 = vadd.f32 0.0, %v844
  %v846 = vpop.f32.mrb[0].mxu0
  %847 = vdwg.mxu0
  %v848 = vadd.f32 %v162, %v845
  %v849 = vxor.u32 %v848, 2147483648
  %v850 = vmul.f32 %v849, 1.442695
  %v851 = vpow.pop %v850
  %v852 = vadd.f32 %v851, 1.0
  %v853 = vrcp.pop %v852
  %v854 = vmul.f32 1.0, %v853
  %v855 = vtanh.pop %v848
  %v856 = vmul.f32 %v854, %v766
  %858 = vrot.lane.b32.xlu0 %v855, 64
  %v859 = vpop.permute.xlu0 %858
  %v861 = vmul.f32 %v854, %v859
  %863 = vrot.lane.b32.xlu0 %v861, 32
  %v864 = vpop.permute.xlu0 %863
  %v866 = vadd.f32 %v856, %v864
  %v867 = vtanh.pop %v866
  %869 = vrot.lane.b32.xlu0 %v867, 64
  %v870 = vpop.permute.xlu0 %869
  %v872 = vmul.f32 %v854, %v870
  %874 = vrot.lane.b32.xlu0 %v872, 32
  %v875 = vpop.permute.xlu0 %874
  %v876 = vsel %vm174, %v875, 0
  %878 = vmatprep.subr.mxu0 0.0
  %879 = vmatpush1.msra.mxu0 %v170
  %880 = vmatprep.subr.mxu0 0.0
  %881 = vmatpush1.msra.mxu0 %v171
  %882 = vmatprep.subr.mxu0 0.0
  %883 = vmatpush1.msra.mxu0 %v172
  %884 = vmatprep.subr.mxu0 0.0
  %885 = vmatpush1.msra.mxu0 %v173
  %886 = vmatprep.subr.mxu0 0.0
  %887 = vmatpush1.msra.mxu0 0.0
  %888 = vmatprep.subr.mxu0 0.0
  %889 = vmatpush1.msra.mxu0 0.0
  %890 = vmatprep.subr.mxu0 0.0
  %891 = vmatpush1.msra.mxu0 0.0
  %892 = vmatprep.subr.mxu0 0.0
  %893 = vmatpush1.msra.mxu0 0.0
  %894 = vmatprep.subr.mxu0 0.0
  %895 = vmatpush1.msra.mxu0 0.0
  %896 = vmatprep.subr.mxu0 0.0
  %897 = vmatpush1.msra.mxu0 0.0
  %898 = vmatprep.subr.mxu0 0.0
  %899 = vmatpush1.msra.mxu0 0.0
  %900 = vmatprep.subr.mxu0 0.0
  %901 = vmatpush1.msra.mxu0 0.0
  %902 = vmatprep.subr.mxu0 0.0
  %903 = vmatpush1.msra.mxu0 0.0
  %904 = vmatprep.subr.mxu0 0.0
  %905 = vmatpush1.msra.mxu0 0.0
  %906 = vmatprep.subr.mxu0 0.0
  %907 = vmatpush1.msra.mxu0 0.0
  %908 = vmatprep.subr.mxu0 0.0
  %909 = vmatpush1.msra.mxu0 0.0
  %910 = vmatprep.subr.mxu0 0.0
  %911 = vmatpush1.msra.mxu0 0.0
  %912 = vmatprep.subr.mxu0 0.0
  %913 = vmatpush1.msra.mxu0 0.0
  %914 = vmatprep.subr.mxu0 0.0
  %915 = vmatpush1.msra.mxu0 0.0
  %916 = vmatprep.subr.mxu0 0.0
  %917 = vmatpush1.msra.mxu0 0.0
  %918 = vmatprep.subr.mxu0 0.0
  %919 = vmatpush1.msra.mxu0 0.0
  %920 = vmatprep.subr.mxu0 0.0
  %921 = vmatpush1.msra.mxu0 0.0
  %922 = vmatprep.subr.mxu0 0.0
  %923 = vmatpush1.msra.mxu0 0.0
  %924 = vmatprep.subr.mxu0 0.0
  %925 = vmatpush1.msra.mxu0 0.0
  %926 = vmatprep.subr.mxu0 0.0
  %927 = vmatpush1.msra.mxu0 0.0
  %928 = vmatprep.subr.mxu0 0.0
  %929 = vmatpush1.msra.mxu0 0.0
  %930 = vmatprep.subr.mxu0 0.0
  %931 = vmatpush1.msra.mxu0 0.0
  %932 = vmatprep.subr.mxu0 0.0
  %933 = vmatpush1.msra.mxu0 0.0
  %934 = vmatprep.subr.mxu0 0.0
  %935 = vmatpush1.msra.mxu0 0.0
  %936 = vmatprep.subr.mxu0 0.0
  %937 = vmatpush1.msra.mxu0 0.0
  %938 = vmatprep.subr.mxu0 0.0
  %939 = vmatpush1.msra.mxu0 0.0
  %940 = vmatprep.subr.mxu0 0.0
  %941 = vmatpush1.msra.mxu0 0.0
  %942 = vmatprep.mubr.f32.mxu0 0.0
  %943 = vmatmul.mubr.f32.gmra.mrb[0].mxu0 %v876
  %v944 = vpop.f32.mrb[0].mxu0
  %v945 = vadd.f32 0.0, %v944
  %v946 = vpop.f32.mrb[0].mxu0
  %947 = vdwg.mxu0
  %v948 = vadd.f32 %v167, %v945
  %v949 = vxor.u32 %v948, 2147483648
  %v950 = vmul.f32 %v949, 1.442695
  %v951 = vpow.pop %v950
  %v952 = vadd.f32 %v951, 1.0
  %v953 = vrcp.pop %v952
  %v954 = vmul.f32 1.0, %v953
  %v955 = vtanh.pop %v948
  %v956 = vmul.f32 %v954, %v866
  %958 = vrot.lane.b32.xlu0 %v955, 64
  %v959 = vpop.permute.xlu0 %958
  %v961 = vmul.f32 %v954, %v959
  %963 = vrot.lane.b32.xlu0 %v961, 32
  %v964 = vpop.permute.xlu0 %963
  %v966 = vadd.f32 %v956, %v964
  %v967 = vtanh.pop %v966
  %969 = vrot.lane.b32.xlu0 %v967, 64
  %v970 = vpop.permute.xlu0 %969
  %v972 = vmul.f32 %v954, %v970
  %v973 = vld [vmem:[%s4] sm:$0xff]
  %v974 = vld [vmem:[%s4 + $0x8] sm:$0xff]
  %v975 = vld [vmem:[%s4 + $0x10] sm:$0xff]
  %v976 = vld [vmem:[%s4 + $0x18] sm:$0xff]
  %v977 = vld [vmem:[%s5] sm:$0x1]
  %v979 = vlaneseq
  %v980 = vshrl.u32 %v979, 7
  %v981 = vsub.s32 0, %v980
  %v982 = vrot.slane %v977, %v981
  %985 = vrot.lane.b32.xlu0 %v972, 32
  %v986 = vpop.permute.xlu0 %985
  %v987 = vsel %vm174, %v986, 0
  %989 = vmatprep.subr.mxu0 0.0
  %990 = vmatpush1.msra.mxu0 %v973
  %991 = vmatprep.subr.mxu0 0.0
  %992 = vmatpush1.msra.mxu0 %v974
  %993 = vmatprep.subr.mxu0 0.0
  %994 = vmatpush1.msra.mxu0 %v975
  %995 = vmatprep.subr.mxu0 0.0
  %996 = vmatpush1.msra.mxu0 %v976
  %997 = vmatprep.subr.mxu0 0.0
  %998 = vmatpush1.msra.mxu0 0.0
  %999 = vmatprep.subr.mxu0 0.0
  %1000 = vmatpush1.msra.mxu0 0.0
  %1001 = vmatprep.subr.mxu0 0.0
  %1002 = vmatpush1.msra.mxu0 0.0
  %1003 = vmatprep.subr.mxu0 0.0
  %1004 = vmatpush1.msra.mxu0 0.0
  %1005 = vmatprep.subr.mxu0 0.0
  %1006 = vmatpush1.msra.mxu0 0.0
  %1007 = vmatprep.subr.mxu0 0.0
  %1008 = vmatpush1.msra.mxu0 0.0
  %1009 = vmatprep.subr.mxu0 0.0
  %1010 = vmatpush1.msra.mxu0 0.0
  %1011 = vmatprep.subr.mxu0 0.0
  %1012 = vmatpush1.msra.mxu0 0.0
  %1013 = vmatprep.subr.mxu0 0.0
  %1014 = vmatpush1.msra.mxu0 0.0
  %1015 = vmatprep.subr.mxu0 0.0
  %1016 = vmatpush1.msra.mxu0 0.0
  %1017 = vmatprep.subr.mxu0 0.0
  %1018 = vmatpush1.msra.mxu0 0.0
  %1019 = vmatprep.subr.mxu0 0.0
  %1020 = vmatpush1.msra.mxu0 0.0
  %1021 = vmatprep.subr.mxu0 0.0
  %1022 = vmatpush1.msra.mxu0 0.0
  %1023 = vmatprep.subr.mxu0 0.0
  %1024 = vmatpush1.msra.mxu0 0.0
  %1025 = vmatprep.subr.mxu0 0.0
  %1026 = vmatpush1.msra.mxu0 0.0
  %1027 = vmatprep.subr.mxu0 0.0
  %1028 = vmatpush1.msra.mxu0 0.0
  %1029 = vmatprep.subr.mxu0 0.0
  %1030 = vmatpush1.msra.mxu0 0.0
  %1031 = vmatprep.subr.mxu0 0.0
  %1032 = vmatpush1.msra.mxu0 0.0
  %1033 = vmatprep.subr.mxu0 0.0
  %1034 = vmatpush1.msra.mxu0 0.0
  %1035 = vmatprep.subr.mxu0 0.0
  %1036 = vmatpush1.msra.mxu0 0.0
  %1037 = vmatprep.subr.mxu0 0.0
  %1038 = vmatpush1.msra.mxu0 0.0
  %1039 = vmatprep.subr.mxu0 0.0
  %1040 = vmatpush1.msra.mxu0 0.0
  %1041 = vmatprep.subr.mxu0 0.0
  %1042 = vmatpush1.msra.mxu0 0.0
  %1043 = vmatprep.subr.mxu0 0.0
  %1044 = vmatpush1.msra.mxu0 0.0
  %1045 = vmatprep.subr.mxu0 0.0
  %1046 = vmatpush1.msra.mxu0 0.0
  %1047 = vmatprep.subr.mxu0 0.0
  %1048 = vmatpush1.msra.mxu0 0.0
  %1049 = vmatprep.subr.mxu0 0.0
  %1050 = vmatpush1.msra.mxu0 0.0
  %1051 = vmatprep.subr.mxu0 0.0
  %1052 = vmatpush1.msra.mxu0 0.0
  %1053 = vmatprep.mubr.f32.mxu0 0.0
  %1054 = vmatmul.mubr.f32.gmra.mrb[0].mxu0 %v987
  %v1055 = vpop.f32.mrb[0].mxu0
  %v1056 = vadd.f32 %v982, %v1055
  %v1057 = vpop.f32.mrb[0].mxu0
  %1058 = vdwg.mxu0
  %v1059 = vmax.f32 %v1056, 0.0
  %1060 = vst [vmem:[%s6] sm:$0xff] %v1059
  // Predicated region
  $region26: #{subnet_mt_forward.1} parent=0 // pred_check
    _
  $region27: #{subnet_mt_forward.1} parent=0 // pred_check_branch
    %1062 = sbr.rel (0) target = $region29
  $region28: #{subnet_mt_forward.1} parent=0 // pred_region
    _
  $region29: #{subnet_mt_forward.1} parent=0 // pred_fallthru
    _
  // Predicated region
  $region30: #{subnet_mt_forward.1} parent=0 // pred_check
    _
  $region31: #{subnet_mt_forward.1} parent=0 // pred_check_branch
    %1064 = sbr.rel (0) target = $region33
  $region32: #{subnet_mt_forward.1} parent=0 // pred_region
    _
  $region33: #{subnet_mt_forward.1} parent=0 // pred_fallthru
    _

</llo_original>
